<compile_context>
chip_gen: v7x
topology: tpu7x:2x2x1
jax: 0.10.0
libtpu: 0.0.40
codegen_flags: <defaults>
</compile_context>

<pallas_src>
import jax
import jax.numpy as jnp
from jax.experimental import pallas as pl
from jax.experimental.pallas import tpu as pltpu


def _hamming_partial_kernel(pred_ref, tgt_ref, psum_ref):
    o = pred_ref[...].astype(jnp.float32)
    t = tgt_ref[...].astype(jnp.float32)
    # t*(1-o) + (1-t)*o == o + t - 2*o*t   (exact algebraic identity)
    v = o + t - 2.0 * (o * t)                       # (block_rows, L)
    r, l = v.shape
    # Fold sublane groups: pure vreg+vreg VPU adds (no XLU), vreg-shaped result.
    psum_ref[...] = jnp.sum(v.reshape(r // 8, 8, l), axis=0)   # (8, L)


def _round_up(x, m):
    return ((x + m - 1) // m) * m


def hamming_loss(output, target, *, max_tile_bytes=2 * 1024 * 1024):
    """output: (B, L) float probabilities; target: (B, L) any numeric dtype.

    Returns scalar float32 = mean(target*(1-output) + (1-target)*output).
    """
    B, L = output.shape
    assert target.shape == (B, L)
    total_n = B * L

    # Tile rows: multiple of 32 (keeps sub-32-bit target tiles aligned), sized
    # so the f32 input tile is ~max_tile_bytes, capped by the (rounded) batch.
    rows_budget = max(32, (max_tile_bytes // (L * 4)) // 32 * 32)
    block_rows = min(rows_budget, _round_up(B, 32))

    num_blocks = pl.cdiv(B, block_rows)
    b_pad = num_blocks * block_rows
    if b_pad != B:
        # Zero rows contribute exactly 0 to the sum (o=0, t=0 -> v=0).
        pad = ((0, b_pad - B), (0, 0))
        output = jnp.pad(output, pad)
        target = jnp.pad(target, pad)

    partials = pl.pallas_call(
        _hamming_partial_kernel,
        out_shape=jax.ShapeDtypeStruct((num_blocks * 8, L), jnp.float32),
        grid_spec=pltpu.PrefetchScalarGridSpec(
            num_scalar_prefetch=0,
            grid=(num_blocks,),
            in_specs=[
                pl.BlockSpec((block_rows, L), lambda i: (i, 0)),
                pl.BlockSpec((block_rows, L), lambda i: (i, 0)),
            ],
            # Lane-dense (L wide), full-vreg (8 sublanes) unmasked stores.
            out_specs=pl.BlockSpec((8, L), lambda i: (i, 0)),
        ),
        compiler_params=pltpu.CompilerParams(
            # Independent per-block partial sums -> safe to shard across TCs (v7x).
            dimension_semantics=("parallel",),
            vmem_limit_bytes=32 * 1024 * 1024,
        ),
    )(output, target)

    # Tiny final reduction + mean scale in plain JAX (num_blocks*8 x L floats).
    return jnp.sum(partials) / jnp.float32(total_n)


def hamming_loss_ref(output, target):
    t = target.astype(jnp.float32)
    o = output.astype(jnp.float32)
    return jnp.mean(t * (1.0 - o) + (1.0 - t) * o)


if __name__ == "__main__":
    key = jax.random.PRNGKey(0)
    k1, k2 = jax.random.split(key)

    B, L = 16, 128  # batch x num_labels (multi-label classification head)
    # output: sigmoid-like probabilities in [0, 1]
    output = jax.nn.sigmoid(jax.random.normal(k1, (B, L), dtype=jnp.float32))
    # target: binary labels, fed as int8 to cut DMA bytes; cast to f32 in-kernel
    target = jax.random.bernoulli(k2, p=0.3, shape=(B, L)).astype(jnp.int8)

    loss = hamming_loss(output, target)
    loss = jax.block_until_ready(loss)

    ref = hamming_loss_ref(output, target)
    assert jnp.allclose(loss, ref, rtol=1e-5, atol=1e-6), (loss, ref)

    print("KERNEL_OK")
</pallas_src>

<mosaic_0001>
module attributes {stable_mosaic.version = 11 : i64} {
  func.func @_hamming_partial_kernel(%arg0: i32, %arg1: memref<32x128xf32, #tpu.memory_space<vmem>>, %arg2: memref<32x128xi8, #tpu.memory_space<vmem>>, %arg3: memref<8x128xf32, #tpu.memory_space<vmem>>) attributes {dimension_semantics = [#tpu.dimension_semantics<parallel>], iteration_bounds = array<i64: 1>, scalar_prefetch = 0 : i64, scratch_operands = 0 : i64, tpu.core_type = #tpu.core_type<tc>, window_params = [{transform_indices = @transform_0, window_bounds = array<i64: 32, 128>}, {transform_indices = @transform_1, window_bounds = array<i64: 32, 128>}, {transform_indices = @transform_2, window_bounds = array<i64: 8, 128>}]} {
    %c0 = arith.constant 0 : index
    %c0_0 = arith.constant 0 : index
    %0 = vector.load %arg1[%c0, %c0_0] : memref<32x128xf32, #tpu.memory_space<vmem>>, vector<32x128xf32>
    %c0_1 = arith.constant 0 : index
    %c0_2 = arith.constant 0 : index
    %1 = vector.load %arg2[%c0_1, %c0_2] : memref<32x128xi8, #tpu.memory_space<vmem>>, vector<32x128xi8>
    %2 = arith.sitofp %1 : vector<32x128xi8> to vector<32x128xf32>
    %3 = arith.addf %0, %2 : vector<32x128xf32>
    %4 = arith.mulf %0, %2 : vector<32x128xf32>
    %cst = arith.constant 2.000000e+00 : f32
    %5 = vector.broadcast %cst : f32 to vector<32x128xf32>
    %6 = arith.mulf %5, %4 : vector<32x128xf32>
    %7 = arith.subf %3, %6 : vector<32x128xf32>
    %8 = vector.shape_cast %7 : vector<32x128xf32> to vector<4x8x128xf32>
    %cst_3 = arith.constant dense<0.000000e+00> : vector<8x128xf32>
    %9 = vector.multi_reduction <add>, %8, %cst_3 [0] : vector<4x8x128xf32> to vector<8x128xf32>
    %c0_4 = arith.constant 0 : index
    %c0_5 = arith.constant 0 : index
    %10 = vector.load %arg3[%c0_4, %c0_5] : memref<8x128xf32, #tpu.memory_space<vmem>>, vector<8x128xf32>
    tpu.vector_store %arg3[%c0_4, %c0_5], %9 {strides = array<i32>} : memref<8x128xf32, #tpu.memory_space<vmem>>, vector<8x128xf32>,
    return
  }
  func.func @transform_0(%arg0: i32) -> (i32, i32) {
    %c0_i32 = arith.constant 0 : i32
    %c0_i32_0 = arith.constant 0 : i32
    return %arg0, %c0_i32 : i32, i32
  }
  func.func @transform_1(%arg0: i32) -> (i32, i32) {
    %c0_i32 = arith.constant 0 : i32
    %c0_i32_0 = arith.constant 0 : i32
    return %arg0, %c0_i32 : i32, i32
  }
  func.func @transform_2(%arg0: i32) -> (i32, i32) {
    %c0_i32 = arith.constant 0 : i32
    %c0_i32_0 = arith.constant 0 : i32
    return %arg0, %c0_i32 : i32, i32
  }
}

</mosaic_0001>

<llo_original>
// kernel: tpu_custom_call.1
$region0: #{tpu_custom_call.1}
  #allocation0 [shape = 'u32[]', space=smem, size = 0x4, offset = 0x4, fixed_abs, tag = 'smem constant byte address 0x4 - core index']
  #allocation1 [shape = 'u32[144,128]{1,0:T(1,128)}', space=vmem, size = 0x12000, scoped, tag = 'internal scratch']
  %s0 = inlined_call_operand.hbm [shape: f32[32,128], index: 0, kind: input, shape index: {}]
  %s1 = inlined_call_operand.hbm [shape: s8[32,128], index: 1, kind: input, shape index: {}]
  %s2 = inlined_call_operand.hbm [shape: f32[8,128], index: 2, kind: output, shape index: {}]
  %s3 = sld [smem:[#allocation0]]
  $region26: #{tpu_custom_call.1} parent=0
    _
  %s5 = ssub.s32 1, %s3
  %s6 = scalar_select 0, %s5, %s3
  $region1: #{tpu_custom_call.1} parent=0
    #allocation2 [shape = 'u8[16384]{0}', space=vmem, size = 0x4000, scoped, tag = 'input window, operand 0, single buffered']
    #allocation3 [shape = 's32[1]{0}', space=sflag, size = 0x4, scoped, tag = 'scoped memory for tpu_custom_call.1']
    #allocation4 [shape = 's32[1]{0}', space=sflag, size = 0x4, scoped, tag = 'scoped memory for tpu_custom_call.1']
    #allocation5 [shape = 'u8[4096]{0}', space=vmem, size = 0x1000, scoped, tag = 'input window, operand 1, single buffered']
    #allocation6 [shape = 's32[1]{0}', space=sflag, size = 0x4, scoped, tag = 'scoped memory for tpu_custom_call.1']
    #allocation7 [shape = 'u8[4096]{0}', space=vmem, size = 0x1000, scoped, tag = 'output window, operand 0, single buffered']
    %7 = vsyncpa [#allocation3], 0
    %8 = vsyncpa [#allocation6], 0
    %9 = vsyncpa [#allocation4], 0
    // Predicated region
    $region2: #{tpu_custom_call.1} parent=1 // pred_check
      _
    $region3: #{tpu_custom_call.1} parent=1 // pred_check_branch
      %11 = sbr.rel (0) target = $region5
    $region4: #{tpu_custom_call.1} parent=1 // pred_region
      %s13 = ssub.s32 512, 512
      %14 = vsyncadd [#allocation3], %s13
      %s15 = sshll.u32 [#allocation2], 4
      %s16 = int_to_ptr.vmem [resolvable:$true] %s15
      %21 = dma.hbm_to_vmem [thread:$0]  %s0, 512, %s16, [#allocation3], 128, 128, 8
    $region5: #{tpu_custom_call.1} parent=1 // pred_fallthru
      _
    // Predicated region
    $region6: #{tpu_custom_call.1} parent=1 // pred_check
      _
    $region7: #{tpu_custom_call.1} parent=1 // pred_check_branch
      %23 = sbr.rel (0) target = $region9
    $region8: #{tpu_custom_call.1} parent=1 // pred_region
      %s25 = ssub.s32 128, 128
      %26 = vsyncadd [#allocation6], %s25
      %s28 = sshll.u32 [#allocation5], 4
      %s29 = int_to_ptr.vmem [resolvable:$true] %s28
      %31 = dma.hbm_to_vmem [thread:$0]  %s1, 128, %s29, [#allocation6]
    $region9: #{tpu_custom_call.1} parent=1 // pred_fallthru
      _
    // Predicated region
    $region10: #{tpu_custom_call.1} parent=1 // pred_check
      _
    $region11: #{tpu_custom_call.1} parent=1 // pred_check_branch
      %33 = sbr.rel (0) target = $region13
    $region12: #{tpu_custom_call.1} parent=1 // pred_region
      %34 = dma.done [#allocation3], 512
    $region13: #{tpu_custom_call.1} parent=1 // pred_fallthru
      _
    // Predicated region
    $region14: #{tpu_custom_call.1} parent=1 // pred_check
      _
    $region15: #{tpu_custom_call.1} parent=1 // pred_check_branch
      %36 = sbr.rel (0) target = $region17
    $region16: #{tpu_custom_call.1} parent=1 // pred_region
      %37 = dma.done [#allocation6], 128
    $region17: #{tpu_custom_call.1} parent=1 // pred_fallthru
      _
    %v38 = vld [vmem:[#allocation2] sm:$0xff]
    %v39 = vld [vmem:[#allocation2 + $0x8] sm:$0xff]
    %v40 = vld [vmem:[#allocation2 + $0x10] sm:$0xff]
    %v41 = vld [vmem:[#allocation2 + $0x18] sm:$0xff]
    %v42 = vld [vmem:[#allocation5] sm:$0xff]
    %v43 = vunpack.c.0.s8 %v42
    %v44 = vunpack.c.1.s8 %v42
    %v45 = vunpack.c.2.s8 %v42
    %v46 = vunpack.c.3.s8 %v42
    %v47 = vcvt.s32.f32 %v43
    %v48 = vcvt.s32.f32 %v44
    %v49 = vcvt.s32.f32 %v45
    %v50 = vcvt.s32.f32 %v46
    %v51 = vadd.f32 %v38, %v47
    %v52 = vadd.f32 %v39, %v48
    %v53 = vadd.f32 %v40, %v49
    %v54 = vadd.f32 %v41, %v50
    %v55 = vmul.f32 %v38, %v47
    %v56 = vmul.f32 %v39, %v48
    %v57 = vmul.f32 %v40, %v49
    %v58 = vmul.f32 %v41, %v50
    %v59 = vmul.f32 %v55, 2.0
    %v60 = vmul.f32 %v56, 2.0
    %v61 = vmul.f32 %v57, 2.0
    %v62 = vmul.f32 %v58, 2.0
    %v63 = vsub.f32 %v51, %v59
    %v64 = vsub.f32 %v52, %v60
    %v65 = vsub.f32 %v53, %v61
    %v66 = vsub.f32 %v54, %v62
    %v67 = vadd.f32 %v63, %v64
    %v68 = vadd.f32 %v67, %v65
    %v69 = vadd.f32 %v68, %v66
    %70 = vst [vmem:[#allocation7] sm:$0xff] %v69
    // Predicated region
    $region18: #{tpu_custom_call.1} parent=1 // pred_check
      _
    $region19: #{tpu_custom_call.1} parent=1 // pred_check_branch
      %72 = sbr.rel (0) target = $region21
    $region20: #{tpu_custom_call.1} parent=1 // pred_region
      %s74 = ssub.s32 128, 128
      %75 = vsyncadd [#allocation4], %s74
      %s77 = sshll.u32 [#allocation7], 4
      %s78 = int_to_ptr.vmem [resolvable:$true] %s77
      %80 = dma.vmem_to_hbm [thread:$0]  %s78, 128, %s2, [#allocation4]
    $region21: #{tpu_custom_call.1} parent=1 // pred_fallthru
      _
    // Predicated region
    $region22: #{tpu_custom_call.1} parent=1 // pred_check
      _
    $region23: #{tpu_custom_call.1} parent=1 // pred_check_branch
      %82 = sbr.rel (0) target = $region25
    $region24: #{tpu_custom_call.1} parent=1 // pred_region
      %83 = dma.done [#allocation4], 128
    $region25: #{tpu_custom_call.1} parent=1 // pred_fallthru
      _
    %84 = vsyncpa [#allocation3], 1
    %85 = vsyncpa [#allocation6], 1
    %86 = vsyncpa [#allocation4], 1

</llo_original>
